<compile_context>
chip_gen: v7x
topology: tpu7x:2x2x1
jax: 0.10.0
libtpu: 0.0.40
codegen_flags: <defaults>
</compile_context>

<pallas_src>
import functools

import jax
import jax.numpy as jnp
from jax.experimental import pallas as pl
from jax.experimental.pallas import tpu as pltpu


def _round_up(x, m):
    return (x + m - 1) // m * m


def _margin_loss_kernel(pred_ref, act_ref, out_ref, *, inv_batch):
    i = pl.program_id(0)

    @pl.when(i == 0)
    def _():
        out_ref[0] = jnp.float32(0.0)

    p = pred_ref[...].astype(jnp.float32)                  # (TB, N, D)
    a = act_ref[...].astype(jnp.float32)                   # (TB, N)

    v_c = jnp.sqrt(jnp.sum(p * p, axis=2) + 1e-7)          # (TB, N)
    v_c = jnp.clip(v_c, 0.0, 1.0)
    left = jnp.maximum(0.9 - v_c, 0.0)
    right = jnp.maximum(v_c - 0.1, 0.0)
    loss = a * left + 0.5 * (1.0 - a) * right              # (TB, N)

    # Per-tile partial reduction accumulated into the resident SMEM scalar.
    out_ref[0] += jnp.sum(loss)

    @pl.when(i == pl.num_programs(0) - 1)
    def _():
        out_ref[0] = out_ref[0] * inv_batch


def capsule_margin_loss(predicted_labels, actual_labels):
    """predicted_labels: (B, N, D) capsule output vectors; actual_labels: (B, N) one-hot."""
    B, N, D = predicted_labels.shape
    pred = predicted_labels.astype(jnp.float32)
    act = actual_labels.astype(jnp.float32)

    # Batch tile: multiple of the f32 sublane (8), capped at 128 rows per grid step.
    TB = min(128, _round_up(B, 8))
    B_pad = _round_up(B, TB)
    if B_pad != B:
        # Zero padding contributes exactly 0 to the loss (see header comment).
        pred = jnp.pad(pred, ((0, B_pad - B), (0, 0), (0, 0)))
        act = jnp.pad(act, ((0, B_pad - B), (0, 0)))

    grid = (B_pad // TB,)

    out = pl.pallas_call(
        functools.partial(_margin_loss_kernel, inv_batch=1.0 / B),
        out_shape=jax.ShapeDtypeStruct((1,), jnp.float32),
        grid=grid,
        in_specs=[
            pl.BlockSpec((TB, N, D), lambda i: (i, 0, 0)),
            pl.BlockSpec((TB, N), lambda i: (i, 0)),
        ],
        out_specs=pl.BlockSpec(memory_space=pltpu.SMEM),
        compiler_params=pltpu.CompilerParams(
            dimension_semantics=("arbitrary",),  # scalar output revisited every step
        ),
    )(pred, act)
    return out[0]


if __name__ == "__main__":
    B, N, D = 2, 10, 16  # batch, number of capsule classes, capsule dimension

    key = jax.random.PRNGKey(0)
    kp, kl = jax.random.split(key)

    predicted = jax.random.normal(kp, (B, N, D), dtype=jnp.float32) * 0.3
    labels_idx = jax.random.randint(kl, (B,), 0, N)
    actual = jax.nn.one_hot(labels_idx, N, dtype=jnp.float32)

    loss = capsule_margin_loss(predicted, actual)
    loss = jax.block_until_ready(loss)

    # Pure-JAX reference mirroring the torch module.
    v_c = jnp.sqrt(jnp.sum(predicted ** 2, axis=2) + 1e-7)
    v_c = jnp.clip(v_c, 0.0, 1.0)
    left = jnp.maximum(0.9 - v_c, 0.0)
    right = jnp.maximum(v_c - 0.1, 0.0)
    ref = jnp.mean(jnp.sum(actual * left + 0.5 * (1.0 - actual) * right, axis=1))

    assert loss.shape == ()
    assert jnp.allclose(loss, ref, atol=1e-5, rtol=1e-5), (loss, ref)

    print("KERNEL_OK")
</pallas_src>

<mosaic_0001>
module attributes {stable_mosaic.version = 11 : i64} {
  func.func @_margin_loss_kernel(%arg0: i32, %arg1: memref<8x10x16xf32, #tpu.memory_space<vmem>>, %arg2: memref<8x10xf32, #tpu.memory_space<vmem>>, %arg3: memref<1xf32, #tpu.memory_space<smem>>) attributes {dimension_semantics = [#tpu.dimension_semantics<arbitrary>], iteration_bounds = array<i64: 1>, scalar_prefetch = 0 : i64, scratch_operands = 0 : i64, tpu.core_type = #tpu.core_type<tc>, window_params = [{transform_indices = @transform_0, window_bounds = array<i64: 8, 10, 16>}, {transform_indices = @transform_1, window_bounds = array<i64: 8, 10>}, {transform_indices = @transform_2, window_bounds = array<i64: 1>}]} {
    %c0_i32 = arith.constant 0 : i32
    %0 = arith.cmpi eq, %arg0, %c0_i32 : i32
    %1 = arith.extui %0 : i1 to i32
    %c0_i32_0 = arith.constant 0 : i32
    %2 = arith.cmpi ne, %1, %c0_i32_0 : i32
    scf.if %2 {
      %cst_19 = arith.constant 0.000000e+00 : f32
      %c0_20 = arith.constant 0 : index
      %39 = memref.load %arg3[%c0_20] : memref<1xf32, #tpu.memory_space<smem>>
      memref.store %cst_19, %arg3[%c0_20] : memref<1xf32, #tpu.memory_space<smem>>
    } else {
    }
    %c0 = arith.constant 0 : index
    %c0_1 = arith.constant 0 : index
    %c0_2 = arith.constant 0 : index
    %3 = vector.load %arg1[%c0, %c0_1, %c0_2] : memref<8x10x16xf32, #tpu.memory_space<vmem>>, vector<8x10x16xf32>
    %c0_3 = arith.constant 0 : index
    %c0_4 = arith.constant 0 : index
    %4 = vector.load %arg2[%c0_3, %c0_4] : memref<8x10xf32, #tpu.memory_space<vmem>>, vector<8x10xf32>
    %5 = arith.mulf %3, %3 : vector<8x10x16xf32>
    %cst = arith.constant dense<0.000000e+00> : vector<8x10xf32>
    %6 = vector.multi_reduction <add>, %5, %cst [2] : vector<8x10x16xf32> to vector<8x10xf32>
    %cst_5 = arith.constant 1.000000e-07 : f32
    %7 = vector.broadcast %cst_5 : f32 to vector<8x10xf32>
    %8 = arith.addf %6, %7 : vector<8x10xf32>
    %9 = math.sqrt %8 : vector<8x10xf32>
    %cst_6 = arith.constant 0.000000e+00 : f32
    %cst_7 = arith.constant 1.000000e+00 : f32
    %10 = vector.broadcast %cst_6 : f32 to vector<8x10xf32>
    %11 = arith.maximumf %10, %9 : vector<8x10xf32>
    %12 = vector.broadcast %cst_7 : f32 to vector<8x10xf32>
    %13 = arith.minimumf %12, %11 : vector<8x10xf32>
    %cst_8 = arith.constant 0.899999976 : f32
    %14 = vector.broadcast %cst_8 : f32 to vector<8x10xf32>
    %15 = arith.subf %14, %13 : vector<8x10xf32>
    %cst_9 = arith.constant 0.000000e+00 : f32
    %16 = vector.broadcast %cst_9 : f32 to vector<8x10xf32>
    %17 = arith.maximumf %15, %16 : vector<8x10xf32>
    %cst_10 = arith.constant 1.000000e-01 : f32
    %18 = vector.broadcast %cst_10 : f32 to vector<8x10xf32>
    %19 = arith.subf %13, %18 : vector<8x10xf32>
    %cst_11 = arith.constant 0.000000e+00 : f32
    %20 = vector.broadcast %cst_11 : f32 to vector<8x10xf32>
    %21 = arith.maximumf %19, %20 : vector<8x10xf32>
    %22 = arith.mulf %4, %17 : vector<8x10xf32>
    %cst_12 = arith.constant 1.000000e+00 : f32
    %23 = vector.broadcast %cst_12 : f32 to vector<8x10xf32>
    %24 = arith.subf %23, %4 : vector<8x10xf32>
    %cst_13 = arith.constant 5.000000e-01 : f32
    %25 = vector.broadcast %cst_13 : f32 to vector<8x10xf32>
    %26 = arith.mulf %25, %24 : vector<8x10xf32>
    %27 = arith.mulf %26, %21 : vector<8x10xf32>
    %28 = arith.addf %22, %27 : vector<8x10xf32>
    %c0_14 = arith.constant 0 : index
    %29 = memref.load %arg3[%c0_14] : memref<1xf32, #tpu.memory_space<smem>>
    %30 = vector.shape_cast %28 : vector<8x10xf32> to vector<1x8x10xf32>
    %cst_15 = arith.constant dense<0.000000e+00> : vector<1xf32>
    %31 = vector.multi_reduction <add>, %30, %cst_15 [1, 2] : vector<1x8x10xf32> to vector<1xf32>
    %32 = vector.shape_cast %31 : vector<1xf32> to vector<1x1x1xf32>
    %33 = vector.extract %32[0, 0, 0] : f32 from vector<1x1x1xf32>
    %34 = arith.addf %29, %33 : f32
    %c0_16 = arith.constant 0 : index
    %35 = memref.load %arg3[%c0_16] : memref<1xf32, #tpu.memory_space<smem>>
    memref.store %34, %arg3[%c0_16] : memref<1xf32, #tpu.memory_space<smem>>
    %c0_i32_17 = arith.constant 0 : i32
    %36 = arith.cmpi eq, %arg0, %c0_i32_17 : i32
    %37 = arith.extui %36 : i1 to i32
    %c0_i32_18 = arith.constant 0 : i32
    %38 = arith.cmpi ne, %37, %c0_i32_18 : i32
    scf.if %38 {
      %c0_19 = arith.constant 0 : index
      %39 = memref.load %arg3[%c0_19] : memref<1xf32, #tpu.memory_space<smem>>
      %cst_20 = arith.constant 5.000000e-01 : f32
      %40 = arith.mulf %39, %cst_20 : f32
      %c0_21 = arith.constant 0 : index
      %41 = memref.load %arg3[%c0_21] : memref<1xf32, #tpu.memory_space<smem>>
      memref.store %40, %arg3[%c0_21] : memref<1xf32, #tpu.memory_space<smem>>
    } else {
    }
    return
  }
  func.func @transform_0(%arg0: i32) -> (i32, i32, i32) {
    %c0_i32 = arith.constant 0 : i32
    %c0_i32_0 = arith.constant 0 : i32
    %c0_i32_1 = arith.constant 0 : i32
    return %arg0, %c0_i32, %c0_i32_0 : i32, i32, i32
  }
  func.func @transform_1(%arg0: i32) -> (i32, i32) {
    %c0_i32 = arith.constant 0 : i32
    %c0_i32_0 = arith.constant 0 : i32
    return %arg0, %c0_i32 : i32, i32
  }
  func.func @transform_2(%arg0: i32) -> i32 {
    %c0_i32 = arith.constant 0 : i32
    %c0_i32_0 = arith.constant 0 : i32
    return %c0_i32 : i32
  }
}

</mosaic_0001>

<llo_original>
// kernel: tpu_custom_call.1
$region0: #{tpu_custom_call.1}
  #allocation0 [shape = 'u32[]', space=smem, size = 0x4, offset = 0x4, fixed_abs, tag = 'smem constant byte address 0x4 - core index']
  #allocation1 [shape = 'u32[144,128]{1,0:T(1,128)}', space=vmem, size = 0x12000, scoped, tag = 'internal scratch']
  %s0 = inlined_call_operand.vmem [shape: f32[8,10,16], index: 0, kind: input, shape index: {}]
  %s1 = inlined_call_operand.vmem [shape: f32[8,10], index: 1, kind: input, shape index: {}]
  %s2 = inlined_call_operand.hbm [shape: f32[1], index: 2, kind: output, shape index: {}]
  %s3 = sld [smem:[#allocation0]]
  $region26: #{tpu_custom_call.1} parent=0
    _
  %s5 = ssub.s32 1, %s3
  %s6 = scalar_select 0, %s5, %s3
  $region1: #{tpu_custom_call.1} parent=0
    #allocation2 [shape = 'u8[512]{0}', space=smem, size = 0x200, scoped, tag = 'output window, operand 0, single buffered']
    #allocation3 [shape = 's32[1]{0}', space=sflag, size = 0x4, scoped, tag = 'scoped memory for tpu_custom_call.1']
    %7 = vsyncpa [#allocation3], 0
    // Predicated region
    $region2: #{tpu_custom_call.1} parent=1 // pred_check
      _
    $region3: #{tpu_custom_call.1} parent=1 // pred_check_branch
      %9 = sbr.rel (0) target = $region5
    $region4: #{tpu_custom_call.1} parent=1 // pred_region
      _
    $region5: #{tpu_custom_call.1} parent=1 // pred_fallthru
      _
    // Predicated region
    $region6: #{tpu_custom_call.1} parent=1 // pred_check
      _
    $region7: #{tpu_custom_call.1} parent=1 // pred_check_branch
      %11 = sbr.rel (0) target = $region9
    $region8: #{tpu_custom_call.1} parent=1 // pred_region
      _
    $region9: #{tpu_custom_call.1} parent=1 // pred_fallthru
      _
    %p12 = scmp.eq.s32.totalorder 0, 0
    // Predicated region
    $region10: #{tpu_custom_call.1} parent=1 // pred_check
      %p13 = pneg %p12
    $region11: #{tpu_custom_call.1} parent=1 // pred_check_branch
      %15 = sbr.rel (%p13) target = $region13
    $region12: #{tpu_custom_call.1} parent=1 // pred_region
      %s16 = scalar_lea.smem [#allocation2], 0
      %17 = sst [smem:[%s16]] 0.0
    $region13: #{tpu_custom_call.1} parent=1 // pred_fallthru
      _
    %v18 = vld [vmem:[%s0] sm:$0xff]
    %v19 = vld [vmem:[%s0 + $0x8] sm:$0x3]
    %v20 = vld [vmem:[%s0 + $0x10] sm:$0xff]
    %v21 = vld [vmem:[%s0 + $0x18] sm:$0x3]
    %v22 = vld [vmem:[%s0 + $0x20] sm:$0xff]
    %v23 = vld [vmem:[%s0 + $0x28] sm:$0x3]
    %v24 = vld [vmem:[%s0 + $0x30] sm:$0xff]
    %v25 = vld [vmem:[%s0 + $0x38] sm:$0x3]
    %v26 = vld [vmem:[%s0 + $0x40] sm:$0xff]
    %v27 = vld [vmem:[%s0 + $0x48] sm:$0x3]
    %v28 = vld [vmem:[%s0 + $0x50] sm:$0xff]
    %v29 = vld [vmem:[%s0 + $0x58] sm:$0x3]
    %v30 = vld [vmem:[%s0 + $0x60] sm:$0xff]
    %v31 = vld [vmem:[%s0 + $0x68] sm:$0x3]
    %v32 = vld [vmem:[%s0 + $0x70] sm:$0xff]
    %v33 = vld [vmem:[%s0 + $0x78] sm:$0x3]
    %v34 = vld [vmem:[%s1] sm:$0xff]
    %v35 = vmul.f32 %v18, %v18
    %v36 = vmul.f32 %v19, %v19
    %v37 = vmul.f32 %v20, %v20
    %v38 = vmul.f32 %v21, %v21
    %v39 = vmul.f32 %v22, %v22
    %v40 = vmul.f32 %v23, %v23
    %v41 = vmul.f32 %v24, %v24
    %v42 = vmul.f32 %v25, %v25
    %v43 = vmul.f32 %v26, %v26
    %v44 = vmul.f32 %v27, %v27
    %v45 = vmul.f32 %v28, %v28
    %v46 = vmul.f32 %v29, %v29
    %v47 = vmul.f32 %v30, %v30
    %v48 = vmul.f32 %v31, %v31
    %v49 = vmul.f32 %v32, %v32
    %v50 = vmul.f32 %v33, %v33
    %vm51 = vcmask 130048
    %v52 = vsel %vm51, %v35, 0.0
    %53 = vadd.xlane.f32.xlu0 %v52
    %v54 = vpop.xlane.xlu0 %53
    %vm55 = vcmask 123904
    %v56 = vsel %vm55, %v36, 0.0
    %57 = vadd.xlane.f32.xlu0 %v56
    %v58 = vpop.xlane.xlu0 %57
    %v59 = vsel %vm51, %v37, 0.0
    %60 = vadd.xlane.f32.xlu0 %v59
    %v61 = vpop.xlane.xlu0 %60
    %v62 = vsel %vm55, %v38, 0.0
    %63 = vadd.xlane.f32.xlu0 %v62
    %v64 = vpop.xlane.xlu0 %63
    %v65 = vsel %vm51, %v39, 0.0
    %66 = vadd.xlane.f32.xlu0 %v65
    %v67 = vpop.xlane.xlu0 %66
    %v68 = vsel %vm55, %v40, 0.0
    %69 = vadd.xlane.f32.xlu0 %v68
    %v70 = vpop.xlane.xlu0 %69
    %v71 = vsel %vm51, %v41, 0.0
    %72 = vadd.xlane.f32.xlu0 %v71
    %v73 = vpop.xlane.xlu0 %72
    %v74 = vsel %vm55, %v42, 0.0
    %75 = vadd.xlane.f32.xlu0 %v74
    %v76 = vpop.xlane.xlu0 %75
    %v77 = vsel %vm51, %v43, 0.0
    %78 = vadd.xlane.f32.xlu0 %v77
    %v79 = vpop.xlane.xlu0 %78
    %v80 = vsel %vm55, %v44, 0.0
    %81 = vadd.xlane.f32.xlu0 %v80
    %v82 = vpop.xlane.xlu0 %81
    %v83 = vsel %vm51, %v45, 0.0
    %84 = vadd.xlane.f32.xlu0 %v83
    %v85 = vpop.xlane.xlu0 %84
    %v86 = vsel %vm55, %v46, 0.0
    %87 = vadd.xlane.f32.xlu0 %v86
    %v88 = vpop.xlane.xlu0 %87
    %v89 = vsel %vm51, %v47, 0.0
    %90 = vadd.xlane.f32.xlu0 %v89
    %v91 = vpop.xlane.xlu0 %90
    %v92 = vsel %vm55, %v48, 0.0
    %93 = vadd.xlane.f32.xlu0 %v92
    %v94 = vpop.xlane.xlu0 %93
    %v95 = vsel %vm51, %v49, 0.0
    %96 = vadd.xlane.f32.xlu0 %v95
    %v97 = vpop.xlane.xlu0 %96
    %v98 = vsel %vm55, %v50, 0.0
    %99 = vadd.xlane.f32.xlu0 %v98
    %v100 = vpop.xlane.xlu0 %99
    %v101 = vadd.f32 %v54, 1e-07
    %v102 = vadd.f32 %v58, 1e-07
    %v103 = vadd.f32 %v61, 1e-07
    %v104 = vadd.f32 %v64, 1e-07
    %v105 = vadd.f32 %v67, 1e-07
    %v106 = vadd.f32 %v70, 1e-07
    %v107 = vadd.f32 %v73, 1e-07
    %v108 = vadd.f32 %v76, 1e-07
    %v109 = vadd.f32 %v79, 1e-07
    %v110 = vadd.f32 %v82, 1e-07
    %v111 = vadd.f32 %v85, 1e-07
    %v112 = vadd.f32 %v88, 1e-07
    %v113 = vadd.f32 %v91, 1e-07
    %v114 = vadd.f32 %v94, 1e-07
    %v115 = vadd.f32 %v97, 1e-07
    %v116 = vadd.f32 %v100, 1e-07
    %v117 = vrsqrt.pop %v101
    %v118 = vmul.f32 %v101, %v117
    %vm119 = vcmp.eq.f32.partialorder %v101, inf
    %v120 = vsel %vm119, %v101, %v118
    %vm121 = vcmp.eq.f32.partialorder %v101, 0.0
    %v122 = vand.u32 %v101, 2147483648
    %v123 = vsel %vm121, %v122, %v120
    %v124 = vrsqrt.pop %v102
    %v125 = vmul.f32 %v102, %v124
    %vm126 = vcmp.eq.f32.partialorder %v102, inf
    %v127 = vsel %vm126, %v102, %v125
    %vm128 = vcmp.eq.f32.partialorder %v102, 0.0
    %v129 = vand.u32 %v102, 2147483648
    %v130 = vsel %vm128, %v129, %v127
    %v131 = vrsqrt.pop %v103
    %v132 = vmul.f32 %v103, %v131
    %vm133 = vcmp.eq.f32.partialorder %v103, inf
    %v134 = vsel %vm133, %v103, %v132
    %vm135 = vcmp.eq.f32.partialorder %v103, 0.0
    %v136 = vand.u32 %v103, 2147483648
    %v137 = vsel %vm135, %v136, %v134
    %v138 = vrsqrt.pop %v104
    %v139 = vmul.f32 %v104, %v138
    %vm140 = vcmp.eq.f32.partialorder %v104, inf
    %v141 = vsel %vm140, %v104, %v139
    %vm142 = vcmp.eq.f32.partialorder %v104, 0.0
    %v143 = vand.u32 %v104, 2147483648
    %v144 = vsel %vm142, %v143, %v141
    %v145 = vrsqrt.pop %v105
    %v146 = vmul.f32 %v105, %v145
    %vm147 = vcmp.eq.f32.partialorder %v105, inf
    %v148 = vsel %vm147, %v105, %v146
    %vm149 = vcmp.eq.f32.partialorder %v105, 0.0
    %v150 = vand.u32 %v105, 2147483648
    %v151 = vsel %vm149, %v150, %v148
    %v152 = vrsqrt.pop %v106
    %v153 = vmul.f32 %v106, %v152
    %vm154 = vcmp.eq.f32.partialorder %v106, inf
    %v155 = vsel %vm154, %v106, %v153
    %vm156 = vcmp.eq.f32.partialorder %v106, 0.0
    %v157 = vand.u32 %v106, 2147483648
    %v158 = vsel %vm156, %v157, %v155
    %v159 = vrsqrt.pop %v107
    %v160 = vmul.f32 %v107, %v159
    %vm161 = vcmp.eq.f32.partialorder %v107, inf
    %v162 = vsel %vm161, %v107, %v160
    %vm163 = vcmp.eq.f32.partialorder %v107, 0.0
    %v164 = vand.u32 %v107, 2147483648
    %v165 = vsel %vm163, %v164, %v162
    %v166 = vrsqrt.pop %v108
    %v167 = vmul.f32 %v108, %v166
    %vm168 = vcmp.eq.f32.partialorder %v108, inf
    %v169 = vsel %vm168, %v108, %v167
    %vm170 = vcmp.eq.f32.partialorder %v108, 0.0
    %v171 = vand.u32 %v108, 2147483648
    %v172 = vsel %vm170, %v171, %v169
    %v173 = vrsqrt.pop %v109
    %v174 = vmul.f32 %v109, %v173
    %vm175 = vcmp.eq.f32.partialorder %v109, inf
    %v176 = vsel %vm175, %v109, %v174
    %vm177 = vcmp.eq.f32.partialorder %v109, 0.0
    %v178 = vand.u32 %v109, 2147483648
    %v179 = vsel %vm177, %v178, %v176
    %v180 = vrsqrt.pop %v110
    %v181 = vmul.f32 %v110, %v180
    %vm182 = vcmp.eq.f32.partialorder %v110, inf
    %v183 = vsel %vm182, %v110, %v181
    %vm184 = vcmp.eq.f32.partialorder %v110, 0.0
    %v185 = vand.u32 %v110, 2147483648
    %v186 = vsel %vm184, %v185, %v183
    %v187 = vrsqrt.pop %v111
    %v188 = vmul.f32 %v111, %v187
    %vm189 = vcmp.eq.f32.partialorder %v111, inf
    %v190 = vsel %vm189, %v111, %v188
    %vm191 = vcmp.eq.f32.partialorder %v111, 0.0
    %v192 = vand.u32 %v111, 2147483648
    %v193 = vsel %vm191, %v192, %v190
    %v194 = vrsqrt.pop %v112
    %v195 = vmul.f32 %v112, %v194
    %vm196 = vcmp.eq.f32.partialorder %v112, inf
    %v197 = vsel %vm196, %v112, %v195
    %vm198 = vcmp.eq.f32.partialorder %v112, 0.0
    %v199 = vand.u32 %v112, 2147483648
    %v200 = vsel %vm198, %v199, %v197
    %v201 = vrsqrt.pop %v113
    %v202 = vmul.f32 %v113, %v201
    %vm203 = vcmp.eq.f32.partialorder %v113, inf
    %v204 = vsel %vm203, %v113, %v202
    %vm205 = vcmp.eq.f32.partialorder %v113, 0.0
    %v206 = vand.u32 %v113, 2147483648
    %v207 = vsel %vm205, %v206, %v204
    %v208 = vrsqrt.pop %v114
    %v209 = vmul.f32 %v114, %v208
    %vm210 = vcmp.eq.f32.partialorder %v114, inf
    %v211 = vsel %vm210, %v114, %v209
    %vm212 = vcmp.eq.f32.partialorder %v114, 0.0
    %v213 = vand.u32 %v114, 2147483648
    %v214 = vsel %vm212, %v213, %v211
    %v215 = vrsqrt.pop %v115
    %v216 = vmul.f32 %v115, %v215
    %vm217 = vcmp.eq.f32.partialorder %v115, inf
    %v218 = vsel %vm217, %v115, %v216
    %vm219 = vcmp.eq.f32.partialorder %v115, 0.0
    %v220 = vand.u32 %v115, 2147483648
    %v221 = vsel %vm219, %v220, %v218
    %v222 = vrsqrt.pop %v116
    %v223 = vmul.f32 %v116, %v222
    %vm224 = vcmp.eq.f32.partialorder %v116, inf
    %v225 = vsel %vm224, %v116, %v223
    %vm226 = vcmp.eq.f32.partialorder %v116, 0.0
    %v227 = vand.u32 %v116, 2147483648
    %v228 = vsel %vm226, %v227, %v225
    %v229 = vmax.f32 %v123, 0.0
    %v230 = vmax.f32 %v130, 0.0
    %v231 = vmax.f32 %v137, 0.0
    %v232 = vmax.f32 %v144, 0.0
    %v233 = vmax.f32 %v151, 0.0
    %v234 = vmax.f32 %v158, 0.0
    %v235 = vmax.f32 %v165, 0.0
    %v236 = vmax.f32 %v172, 0.0
    %v237 = vmax.f32 %v179, 0.0
    %v238 = vmax.f32 %v186, 0.0
    %v239 = vmax.f32 %v193, 0.0
    %v240 = vmax.f32 %v200, 0.0
    %v241 = vmax.f32 %v207, 0.0
    %v242 = vmax.f32 %v214, 0.0
    %v243 = vmax.f32 %v221, 0.0
    %v244 = vmax.f32 %v228, 0.0
    %v245 = vmin.f32 %v229, 1.0
    %v246 = vmin.f32 %v230, 1.0
    %v247 = vmin.f32 %v231, 1.0
    %v248 = vmin.f32 %v232, 1.0
    %v249 = vmin.f32 %v233, 1.0
    %v250 = vmin.f32 %v234, 1.0
    %v251 = vmin.f32 %v235, 1.0
    %v252 = vmin.f32 %v236, 1.0
    %v253 = vmin.f32 %v237, 1.0
    %v254 = vmin.f32 %v238, 1.0
    %v255 = vmin.f32 %v239, 1.0
    %v256 = vmin.f32 %v240, 1.0
    %v257 = vmin.f32 %v241, 1.0
    %v258 = vmin.f32 %v242, 1.0
    %v259 = vmin.f32 %v243, 1.0
    %v260 = vmin.f32 %v244, 1.0
    %v261 = vsub.f32 0.9, %v245
    %v262 = vsub.f32 0.9, %v246
    %v263 = vsub.f32 0.9, %v247
    %v264 = vsub.f32 0.9, %v248
    %v265 = vsub.f32 0.9, %v249
    %v266 = vsub.f32 0.9, %v250
    %v267 = vsub.f32 0.9, %v251
    %v268 = vsub.f32 0.9, %v252
    %v269 = vsub.f32 0.9, %v253
    %v270 = vsub.f32 0.9, %v254
    %v271 = vsub.f32 0.9, %v255
    %v272 = vsub.f32 0.9, %v256
    %v273 = vsub.f32 0.9, %v257
    %v274 = vsub.f32 0.9, %v258
    %v275 = vsub.f32 0.9, %v259
    %v276 = vsub.f32 0.9, %v260
    %v277 = vmax.f32 %v261, 0.0
    %v278 = vmax.f32 %v262, 0.0
    %v279 = vmax.f32 %v263, 0.0
    %v280 = vmax.f32 %v264, 0.0
    %v281 = vmax.f32 %v265, 0.0
    %v282 = vmax.f32 %v266, 0.0
    %v283 = vmax.f32 %v267, 0.0
    %v284 = vmax.f32 %v268, 0.0
    %v285 = vmax.f32 %v269, 0.0
    %v286 = vmax.f32 %v270, 0.0
    %v287 = vmax.f32 %v271, 0.0
    %v288 = vmax.f32 %v272, 0.0
    %v289 = vmax.f32 %v273, 0.0
    %v290 = vmax.f32 %v274, 0.0
    %v291 = vmax.f32 %v275, 0.0
    %v292 = vmax.f32 %v276, 0.0
    %v293 = vsub.f32 %v245, 0.1
    %v294 = vsub.f32 %v246, 0.1
    %v295 = vsub.f32 %v247, 0.1
    %v296 = vsub.f32 %v248, 0.1
    %v297 = vsub.f32 %v249, 0.1
    %v298 = vsub.f32 %v250, 0.1
    %v299 = vsub.f32 %v251, 0.1
    %v300 = vsub.f32 %v252, 0.1
    %v301 = vsub.f32 %v253, 0.1
    %v302 = vsub.f32 %v254, 0.1
    %v303 = vsub.f32 %v255, 0.1
    %v304 = vsub.f32 %v256, 0.1
    %v305 = vsub.f32 %v257, 0.1
    %v306 = vsub.f32 %v258, 0.1
    %v307 = vsub.f32 %v259, 0.1
    %v308 = vsub.f32 %v260, 0.1
    %v309 = vmax.f32 %v293, 0.0
    %v310 = vmax.f32 %v294, 0.0
    %v311 = vmax.f32 %v295, 0.0
    %v312 = vmax.f32 %v296, 0.0
    %v313 = vmax.f32 %v297, 0.0
    %v314 = vmax.f32 %v298, 0.0
    %v315 = vmax.f32 %v299, 0.0
    %v316 = vmax.f32 %v300, 0.0
    %v317 = vmax.f32 %v301, 0.0
    %v318 = vmax.f32 %v302, 0.0
    %v319 = vmax.f32 %v303, 0.0
    %v320 = vmax.f32 %v304, 0.0
    %v321 = vmax.f32 %v305, 0.0
    %v322 = vmax.f32 %v306, 0.0
    %v323 = vmax.f32 %v307, 0.0
    %v324 = vmax.f32 %v308, 0.0
    %v341 = vlaneseq
    %v342 = vand.u32 %v341, 127
    %v343 = vlaneseq
    %v344 = vshrl.u32 %v343, 7
    %v345 = vsub.s32 %v342, %v344
    %v346 = vrot.slane %v277, %v345
    %v347 = vadd.s32 %v342, 4294967288
    %v348 = vlaneseq
    %v349 = vshrl.u32 %v348, 7
    %v350 = vsub.s32 %v347, %v349
    %v351 = vrot.slane %v278, %v350
    %vm352 = vcmask 130112
    %v353 = vsel %vm352, %v351, %v346
    %v354 = vlaneseq
    %v355 = vshrl.u32 %v354, 7
    %v356 = vsub.s32 %v342, %v355
    %v357 = vrot.slane %v279, %v356
    %v358 = vlaneseq
    %v359 = vshrl.u32 %v358, 7
    %v360 = vsub.s32 %v347, %v359
    %v361 = vrot.slane %v280, %v360
    %v362 = vsel %vm352, %v361, %v357
    %v363 = vlaneseq
    %v364 = vshrl.u32 %v363, 7
    %v365 = vsub.s32 %v342, %v364
    %v366 = vrot.slane %v281, %v365
    %v367 = vlaneseq
    %v368 = vshrl.u32 %v367, 7
    %v369 = vsub.s32 %v347, %v368
    %v370 = vrot.slane %v282, %v369
    %v371 = vsel %vm352, %v370, %v366
    %v372 = vlaneseq
    %v373 = vshrl.u32 %v372, 7
    %v374 = vsub.s32 %v342, %v373
    %v375 = vrot.slane %v283, %v374
    %v376 = vlaneseq
    %v377 = vshrl.u32 %v376, 7
    %v378 = vsub.s32 %v347, %v377
    %v379 = vrot.slane %v284, %v378
    %v380 = vsel %vm352, %v379, %v375
    %v381 = vlaneseq
    %v382 = vshrl.u32 %v381, 7
    %v383 = vsub.s32 %v342, %v382
    %v384 = vrot.slane %v285, %v383
    %v385 = vlaneseq
    %v386 = vshrl.u32 %v385, 7
    %v387 = vsub.s32 %v347, %v386
    %v388 = vrot.slane %v286, %v387
    %v389 = vsel %vm352, %v388, %v384
    %v390 = vlaneseq
    %v391 = vshrl.u32 %v390, 7
    %v392 = vsub.s32 %v342, %v391
    %v393 = vrot.slane %v287, %v392
    %v394 = vlaneseq
    %v395 = vshrl.u32 %v394, 7
    %v396 = vsub.s32 %v347, %v395
    %v397 = vrot.slane %v288, %v396
    %v398 = vsel %vm352, %v397, %v393
    %v399 = vlaneseq
    %v400 = vshrl.u32 %v399, 7
    %v401 = vsub.s32 %v342, %v400
    %v402 = vrot.slane %v289, %v401
    %v403 = vlaneseq
    %v404 = vshrl.u32 %v403, 7
    %v405 = vsub.s32 %v347, %v404
    %v406 = vrot.slane %v290, %v405
    %v407 = vsel %vm352, %v406, %v402
    %v408 = vlaneseq
    %v409 = vshrl.u32 %v408, 7
    %v410 = vsub.s32 %v342, %v409
    %v411 = vrot.slane %v291, %v410
    %v412 = vlaneseq
    %v413 = vshrl.u32 %v412, 7
    %v414 = vsub.s32 %v347, %v413
    %v415 = vrot.slane %v292, %v414
    %v416 = vsel %vm352, %v415, %v411
    %vm417 = vcmask 1041409
    %v418 = vsel %vm417, %v362, %v353
    %vm419 = vcmask 1042434
    %v420 = vsel %vm419, %v371, %v418
    %vm421 = vcmask 1043459
    %v422 = vsel %vm421, %v380, %v420
    %vm423 = vcmask 1044484
    %v424 = vsel %vm423, %v389, %v422
    %vm425 = vcmask 1045509
    %v426 = vsel %vm425, %v398, %v424
    %vm427 = vcmask 1046534
    %v428 = vsel %vm427, %v407, %v426
    %vm429 = vcmask 1047559
    %v430 = vsel %vm429, %v416, %v428
    %v432 = vmul.f32 %v34, %v430
    %v433 = vsub.f32 1.0, %v34
    %v434 = vmul.f32 %v433, 0.5
    %v451 = vlaneseq
    %v452 = vshrl.u32 %v451, 7
    %v453 = vsub.s32 %v342, %v452
    %v454 = vrot.slane %v309, %v453
    %v455 = vlaneseq
    %v456 = vshrl.u32 %v455, 7
    %v457 = vsub.s32 %v347, %v456
    %v458 = vrot.slane %v310, %v457
    %v459 = vsel %vm352, %v458, %v454
    %v460 = vlaneseq
    %v461 = vshrl.u32 %v460, 7
    %v462 = vsub.s32 %v342, %v461
    %v463 = vrot.slane %v311, %v462
    %v464 = vlaneseq
    %v465 = vshrl.u32 %v464, 7
    %v466 = vsub.s32 %v347, %v465
    %v467 = vrot.slane %v312, %v466
    %v468 = vsel %vm352, %v467, %v463
    %v469 = vlaneseq
    %v470 = vshrl.u32 %v469, 7
    %v471 = vsub.s32 %v342, %v470
    %v472 = vrot.slane %v313, %v471
    %v473 = vlaneseq
    %v474 = vshrl.u32 %v473, 7
    %v475 = vsub.s32 %v347, %v474
    %v476 = vrot.slane %v314, %v475
    %v477 = vsel %vm352, %v476, %v472
    %v478 = vlaneseq
    %v479 = vshrl.u32 %v478, 7
    %v480 = vsub.s32 %v342, %v479
    %v481 = vrot.slane %v315, %v480
    %v482 = vlaneseq
    %v483 = vshrl.u32 %v482, 7
    %v484 = vsub.s32 %v347, %v483
    %v485 = vrot.slane %v316, %v484
    %v486 = vsel %vm352, %v485, %v481
    %v487 = vlaneseq
    %v488 = vshrl.u32 %v487, 7
    %v489 = vsub.s32 %v342, %v488
    %v490 = vrot.slane %v317, %v489
    %v491 = vlaneseq
    %v492 = vshrl.u32 %v491, 7
    %v493 = vsub.s32 %v347, %v492
    %v494 = vrot.slane %v318, %v493
    %v495 = vsel %vm352, %v494, %v490
    %v496 = vlaneseq
    %v497 = vshrl.u32 %v496, 7
    %v498 = vsub.s32 %v342, %v497
    %v499 = vrot.slane %v319, %v498
    %v500 = vlaneseq
    %v501 = vshrl.u32 %v500, 7
    %v502 = vsub.s32 %v347, %v501
    %v503 = vrot.slane %v320, %v502
    %v504 = vsel %vm352, %v503, %v499
    %v505 = vlaneseq
    %v506 = vshrl.u32 %v505, 7
    %v507 = vsub.s32 %v342, %v506
    %v508 = vrot.slane %v321, %v507
    %v509 = vlaneseq
    %v510 = vshrl.u32 %v509, 7
    %v511 = vsub.s32 %v347, %v510
    %v512 = vrot.slane %v322, %v511
    %v513 = vsel %vm352, %v512, %v508
    %v514 = vlaneseq
    %v515 = vshrl.u32 %v514, 7
    %v516 = vsub.s32 %v342, %v515
    %v517 = vrot.slane %v323, %v516
    %v518 = vlaneseq
    %v519 = vshrl.u32 %v518, 7
    %v520 = vsub.s32 %v347, %v519
    %v521 = vrot.slane %v324, %v520
    %v522 = vsel %vm352, %v521, %v517
    %v523 = vsel %vm417, %v468, %v459
    %v524 = vsel %vm419, %v477, %v523
    %v525 = vsel %vm421, %v486, %v524
    %v526 = vsel %vm423, %v495, %v525
    %v527 = vsel %vm425, %v504, %v526
    %v528 = vsel %vm427, %v513, %v527
    %v529 = vsel %vm429, %v522, %v528
    %v531 = vmul.f32 %v434, %v529
    %v532 = vadd.f32 %v432, %v531
    %s533 = sld [smem:[#allocation2]]
    %vm534 = vcmask 80896
    %v535 = vsel %vm534, %v532, 0.0
    %536 = vadd.xlane.f32.xlu0 %v535
    %v537 = vpop.xlane.xlu0 %536
    %v538 = vrot.slane %v537, 4
    %v539 = vadd.f32 %v537, %v538
    %v540 = vrot.slane %v539, 2
    %v541 = vadd.f32 %v539, %v540
    %v542 = vrot.slane %v541, 1
    %v543 = vadd.f32 %v541, %v542
    %s544 = vtos %v543
    %s545 = sadd.f32 %s533, %s544
    %s546 = scalar_lea.smem [#allocation2], 0
    %547 = sst [smem:[%s546]] %s545
    // Predicated region
    $region14: #{tpu_custom_call.1} parent=1 // pred_check
      %p548 = pneg %p12
    $region15: #{tpu_custom_call.1} parent=1 // pred_check_branch
      %550 = sbr.rel (%p548) target = $region17
    $region16: #{tpu_custom_call.1} parent=1 // pred_region
      %s551 = sld [smem:[#allocation2]]
      %s552 = smul.f32 %s551, 0.5
      %553 = sst [smem:[%s546]] %s552
    $region17: #{tpu_custom_call.1} parent=1 // pred_fallthru
      _
    // Predicated region
    $region18: #{tpu_custom_call.1} parent=1 // pred_check
      _
    $region19: #{tpu_custom_call.1} parent=1 // pred_check_branch
      %555 = sbr.rel (0) target = $region21
    $region20: #{tpu_custom_call.1} parent=1 // pred_region
      %s557 = ssub.s32 16, 16
      %558 = vsyncadd [#allocation3], %s557
      %561 = dma.smem_to_hbm [#allocation2], 16, %s2, [#allocation3]
    $region21: #{tpu_custom_call.1} parent=1 // pred_fallthru
      _
    // Predicated region
    $region22: #{tpu_custom_call.1} parent=1 // pred_check
      _
    $region23: #{tpu_custom_call.1} parent=1 // pred_check_branch
      %563 = sbr.rel (0) target = $region25
    $region24: #{tpu_custom_call.1} parent=1 // pred_region
      %564 = dma.done [#allocation3], 16
    $region25: #{tpu_custom_call.1} parent=1 // pred_fallthru
      _
    %565 = sfence
    %566 = vsyncpa [#allocation3], 1

</llo_original>
